<compile_context>
chip_gen: v6e
topology: v6e:2x2x1
jax: 0.10.0
libtpu: 0.0.40
codegen_flags: <defaults>
</compile_context>

<pallas_src>
import functools
import math

import jax
import jax.numpy as jnp
from jax.experimental import pallas as pl
from jax.experimental.pallas import tpu as pltpu


# ------------------------------ tiling helpers ------------------------------

def _round_up(x, m):
    return ((x + m - 1) // m) * m


def _pad2(a, rows, cols):
    pr, pc = rows - a.shape[0], cols - a.shape[1]
    if pr == 0 and pc == 0:
        return a
    return jnp.pad(a, ((0, pr), (0, pc)))


def _tile_m(m, max_tm=512):
    """Divisor-aware row tiling: minimize padding of the M (token) axis."""
    mp = _round_up(m, 8)
    if mp <= max_tm:
        return mp, mp
    for tm in range(max_tm - (max_tm % 8), 127, -8):
        if mp % tm == 0:
            return tm, mp
    tm = max_tm - (max_tm % 8)
    return tm, _round_up(mp, tm)


def _tile_n(n, max_tn=512):
    """Full-N block when it fits; otherwise 128-multiple tiles (no padding
    needed for any realistic CLIP width)."""
    if n <= max_tn:
        return n, n
    np_ = _round_up(n, 128)
    for tn in (512, 256, 128):
        if tn <= max_tn and np_ % tn == 0:
            return tn, np_
    return 128, np_


def _tile_k(k, max_tk=4096):
    """Full-K block by default (removes the reduction grid axis)."""
    if k <= max_tk:
        return k, k
    kp = _round_up(k, 128)
    for tk in (2048, 1024, 512, 256, 128):
        if tk <= max_tk and kp % tk == 0:
            return tk, kp
    return 128, kp


def _default_vmem_limit():
    try:
        cap = int(pltpu.get_tpu_info().vmem_capacity_bytes)
    except Exception:
        cap = 64 * 1024 * 1024           # conservative (v7x) fallback
    return max(32 * 1024 * 1024, min(96 * 1024 * 1024, (cap * 3) // 4))


_VMEM_LIMIT = _default_vmem_limit()      # ~96 MiB on v5e/v6e, ~48 MiB on v7x


# ----------------------------- Pallas kernels ------------------------------

def _matmul_fullk_kernel(*refs, activation, has_res):
    """Single-K-block matmul: o = act(x @ w + b) [+ residual], f32 math."""
    if has_res:
        x_ref, w_ref, b_ref, res_ref, o_ref = refs
    else:
        x_ref, w_ref, b_ref, o_ref = refs
        res_ref = None
    acc = jnp.dot(x_ref[...], w_ref[...], preferred_element_type=jnp.float32)
    acc = acc + b_ref[...]
    if activation == "quick_gelu":                 # CLIP QuickGELU
        acc = acc * jax.nn.sigmoid(1.702 * acc)
    if res_ref is not None:
        acc = acc + res_ref[...].astype(jnp.float32)
    o_ref[...] = acc.astype(o_ref.dtype)


def _matmul_ktiled_kernel(*refs, activation, has_res):
    """Fallback K-tiled matmul (only used when K > max_tk)."""
    if has_res:
        x_ref, w_ref, b_ref, res_ref, o_ref, acc_ref = refs
    else:
        x_ref, w_ref, b_ref, o_ref, acc_ref = refs
        res_ref = None
    k = pl.program_id(2)

    @pl.when(k == 0)
    def _():
        acc_ref[...] = jnp.zeros_like(acc_ref)

    acc_ref[...] += jnp.dot(x_ref[...], w_ref[...],
                            preferred_element_type=jnp.float32)

    @pl.when(k == pl.num_programs(2) - 1)
    def _():
        acc = acc_ref[...] + b_ref[...]
        if activation == "quick_gelu":
            acc = acc * jax.nn.sigmoid(1.702 * acc)
        if res_ref is not None:
            acc = acc + res_ref[...].astype(jnp.float32)
        o_ref[...] = acc.astype(o_ref.dtype)


def _ln_matmul_kernel(x_ref, g_ref, beta_ref, w_ref, b_ref, o_ref, y_ref, *,
                      eps, activation):
    """Fused LayerNorm + matmul + bias (+QuickGELU).

    The normalized row block is computed once per M tile (at j == 0) into a
    bf16 VMEM scratch and reused across all N tiles.
    """
    j = pl.program_id(1)

    @pl.when(j == 0)
    def _():
        x = x_ref[...].astype(jnp.float32)
        mean = jnp.mean(x, axis=-1, keepdims=True)
        var = jnp.mean(jnp.square(x - mean), axis=-1, keepdims=True)
        y = (x - mean) * jax.lax.rsqrt(var + eps)
        y = y * g_ref[...] + beta_ref[...]
        y_ref[...] = y.astype(y_ref.dtype)

    acc = jnp.dot(y_ref[...], w_ref[...], preferred_element_type=jnp.float32)
    acc = acc + b_ref[...]
    if activation == "quick_gelu":
        acc = acc * jax.nn.sigmoid(1.702 * acc)
    o_ref[...] = acc.astype(o_ref.dtype)


def _layernorm_kernel(x_ref, g_ref, b_ref, o_ref, *, eps):
    x = x_ref[...].astype(jnp.float32)
    mean = jnp.mean(x, axis=-1, keepdims=True)
    var = jnp.mean(jnp.square(x - mean), axis=-1, keepdims=True)
    y = (x - mean) * jax.lax.rsqrt(var + eps)
    o_ref[...] = (y * g_ref[...] + b_ref[...]).astype(o_ref.dtype)


def _attention_kernel(q_ref, k_ref, v_ref, o_ref, *, scale, causal):
    """One (batch, head) pair per grid step.  q/k/v arrive as lane-offset-0
    (1,1,S,Dh) blocks via BlockSpec — no in-kernel lane slices or concat.
    The causal mask (text tower) is generated with iota; the vision tower
    skips the masking entirely."""
    q = q_ref[0, 0]                      # (S, Dh) bf16
    k = k_ref[0, 0]
    v = v_ref[0, 0]
    s = jax.lax.dot_general(q, k, (((1,), (1,)), ((), ())),
                            preferred_element_type=jnp.float32) * scale
    if causal:
        S = s.shape[0]
        row = jax.lax.broadcasted_iota(jnp.int32, (S, S), 0)
        col = jax.lax.broadcasted_iota(jnp.int32, (S, S), 1)
        s = jnp.where(col > row, jnp.float32(-1e9), s)
    m = jnp.max(s, axis=-1, keepdims=True)
    e = jnp.exp(s - m)
    p = e * pl.reciprocal(jnp.sum(e, axis=-1, keepdims=True), approx=True)
    o = jnp.dot(p.astype(v.dtype), v, preferred_element_type=jnp.float32)
    o_ref[0, 0] = o.astype(o_ref.dtype)


def _clip_logits_kernel(img_ref, txt_ref, ls_ref, logits_ref, imgn_ref):
    img = img_ref[...].astype(jnp.float32)
    txt = txt_ref[...].astype(jnp.float32)
    img_n = img * jax.lax.rsqrt(jnp.sum(img * img, axis=-1, keepdims=True))
    txt_n = txt * jax.lax.rsqrt(jnp.sum(txt * txt, axis=-1, keepdims=True))
    scale = jnp.exp(ls_ref[0, 0])
    logits = scale * jax.lax.dot_general(          # contract last dims; no .T
        img_n, txt_n, (((1,), (1,)), ((), ())),
        preferred_element_type=jnp.float32)
    logits_ref[...] = logits.astype(logits_ref.dtype)
    imgn_ref[...] = img_n.astype(imgn_ref.dtype)


# ------------------------------ Pallas wrappers -----------------------------

def linear(x, w, b, activation=None, residual=None, out_dtype=None,
           max_tm=512, max_tn=512, max_tk=4096):
    """x: (..., K) @ w: (K, N) + b [+ residual] — Pallas matmul, bf16 MXU,
    f32 accumulation, bias / QuickGELU / residual fused in the epilogue."""
    lead = x.shape[:-1]
    K, N = w.shape
    M = math.prod(lead)
    out_dtype = x.dtype if out_dtype is None else out_dtype

    tm, Mp = _tile_m(M, max_tm)
    tn, Np = _tile_n(N, max_tn)
    tk, Kp = _tile_k(K, max_tk)

    x2 = _pad2(x.reshape(M, K), Mp, Kp)
    if x2.dtype != jnp.bfloat16:
        x2 = x2.astype(jnp.bfloat16)
    wp = _pad2(w, Kp, Np)
    if wp.dtype != jnp.bfloat16:                 # weights are pre-cast at init
        wp = wp.astype(jnp.bfloat16)
    bp = _pad2(b.astype(jnp.float32).reshape(1, N), 1, Np)

    has_res = residual is not None
    operands = [x2, wp, bp]
    if has_res:
        operands.append(_pad2(residual.reshape(M, N), Mp, Np))

    if Kp == tk:                                  # full-K: no reduction axis
        in_specs = [pl.BlockSpec((tm, tk), lambda i, j: (i, 0)),
                    pl.BlockSpec((tk, tn), lambda i, j: (0, j)),
                    pl.BlockSpec((1, tn), lambda i, j: (0, j))]
        if has_res:
            in_specs.append(pl.BlockSpec((tm, tn), lambda i, j: (i, j)))
        out = pl.pallas_call(
            functools.partial(_matmul_fullk_kernel, activation=activation,
                              has_res=has_res),
            out_shape=jax.ShapeDtypeStruct((Mp, Np), out_dtype),
            grid=(Mp // tm, Np // tn),
            in_specs=in_specs,
            out_specs=pl.BlockSpec((tm, tn), lambda i, j: (i, j)),
            compiler_params=pltpu.CompilerParams(
                dimension_semantics=("parallel", "parallel"),
                vmem_limit_bytes=_VMEM_LIMIT),
        )(*operands)
    else:                                         # K-tiled fallback
        in_specs = [pl.BlockSpec((tm, tk), lambda i, j, k: (i, k)),
                    pl.BlockSpec((tk, tn), lambda i, j, k: (k, j)),
                    pl.BlockSpec((1, tn), lambda i, j, k: (0, j))]
        if has_res:
            in_specs.append(pl.BlockSpec((tm, tn), lambda i, j, k: (i, j)))
        out = pl.pallas_call(
            functools.partial(_matmul_ktiled_kernel, activation=activation,
                              has_res=has_res),
            out_shape=jax.ShapeDtypeStruct((Mp, Np), out_dtype),
            grid=(Mp // tm, Np // tn, Kp // tk),
            in_specs=in_specs,
            out_specs=pl.BlockSpec((tm, tn), lambda i, j, k: (i, j)),
            scratch_shapes=[pltpu.VMEM((tm, tn), jnp.float32)],
            compiler_params=pltpu.CompilerParams(
                dimension_semantics=("parallel", "parallel", "arbitrary"),
                vmem_limit_bytes=_VMEM_LIMIT),
        )(*operands)
    return out[:M, :N].reshape(*lead, N)


def fused_ln_linear(x, gamma, beta, w, b, activation=None, out_dtype=None,
                    eps=1e-5, max_tm=512, max_tn=512):
    """LayerNorm(x) @ w + b fused in one kernel (full K per block); the LN
    result is cached in VMEM and reused across N tiles."""
    lead = x.shape[:-1]
    K, N = w.shape
    M = math.prod(lead)
    out_dtype = x.dtype if out_dtype is None else out_dtype

    tm, Mp = _tile_m(M, max_tm)
    tn, Np = _tile_n(N, max_tn)

    x2 = _pad2(x.reshape(M, K), Mp, K)
    if x2.dtype != jnp.bfloat16:
        x2 = x2.astype(jnp.bfloat16)
    wp = _pad2(w, K, Np)
    if wp.dtype != jnp.bfloat16:
        wp = wp.astype(jnp.bfloat16)
    bp = _pad2(b.astype(jnp.float32).reshape(1, N), 1, Np)
    g2 = gamma.astype(jnp.float32).reshape(1, K)
    be2 = beta.astype(jnp.float32).reshape(1, K)

    out = pl.pallas_call(
        functools.partial(_ln_matmul_kernel, eps=eps, activation=activation),
        out_shape=jax.ShapeDtypeStruct((Mp, Np), out_dtype),
        grid=(Mp // tm, Np // tn),
        in_specs=[pl.BlockSpec((tm, K), lambda i, j: (i, 0)),
                  pl.BlockSpec((1, K), lambda i, j: (0, 0)),
                  pl.BlockSpec((1, K), lambda i, j: (0, 0)),
                  pl.BlockSpec((K, tn), lambda i, j: (0, j)),
                  pl.BlockSpec((1, tn), lambda i, j: (0, j))],
        out_specs=pl.BlockSpec((tm, tn), lambda i, j: (i, j)),
        scratch_shapes=[pltpu.VMEM((tm, K), jnp.bfloat16)],
        compiler_params=pltpu.CompilerParams(
            # N axis "arbitrary": the LN scratch is filled at j == 0 and must
            # be visited sequentially within each row tile.
            dimension_semantics=("parallel", "arbitrary"),
            vmem_limit_bytes=_VMEM_LIMIT),
    )(x2, g2, be2, wp, bp)
    return out[:M, :N].reshape(*lead, N)


def layer_norm(x, g, b, eps=1e-5, max_tm=512):
    """Row-tiled standalone LayerNorm (used only for ln_pre)."""
    lead, D = x.shape[:-1], x.shape[-1]
    M = math.prod(lead)
    tm, Mp = _tile_m(M, max_tm)
    x2 = _pad2(x.reshape(M, D), Mp, D)

    out = pl.pallas_call(
        functools.partial(_layernorm_kernel, eps=eps),
        out_shape=jax.ShapeDtypeStruct((Mp, D), x.dtype),
        grid=(Mp // tm,),
        in_specs=[pl.BlockSpec((tm, D), lambda i: (i, 0)),
                  pl.BlockSpec((1, D), lambda i: (0, 0)),
                  pl.BlockSpec((1, D), lambda i: (0, 0))],
        out_specs=pl.BlockSpec((tm, D), lambda i: (i, 0)),
        compiler_params=pltpu.CompilerParams(
            dimension_semantics=("parallel",),
            vmem_limit_bytes=_VMEM_LIMIT),
    )(x2, g.astype(jnp.float32).reshape(1, D),
      b.astype(jnp.float32).reshape(1, D))
    return out[:M].reshape(*lead, D)


def attention(q, k, v, scale, causal):
    """q/k/v: (B, H, S, Dh).  Grid over (batch, heads): per-head blocks land
    lane-offset-0 in VMEM, both axes parallel (v7x dual-TC / v6e megacore)."""
    B, H, S, Dh = q.shape
    spec = pl.BlockSpec((1, 1, S, Dh), lambda b, h: (b, h, 0, 0))
    return pl.pallas_call(
        functools.partial(_attention_kernel, scale=scale, causal=causal),
        out_shape=jax.ShapeDtypeStruct((B, H, S, Dh), q.dtype),
        grid=(B, H),
        in_specs=[spec, spec, spec],
        out_specs=spec,
        compiler_params=pltpu.CompilerParams(
            dimension_semantics=("parallel", "parallel"),
            vmem_limit_bytes=_VMEM_LIMIT),
    )(q, k, v)


def clip_logits(img_feats, txt_feats, logit_scale):
    """Fused: normalize both feature sets, scale by exp(logit_scale), matmul."""
    B, D = img_feats.shape
    C = txt_feats.shape[0]
    ls = jnp.reshape(logit_scale, (1, 1)).astype(jnp.float32)
    return pl.pallas_call(
        _clip_logits_kernel,
        out_shape=(jax.ShapeDtypeStruct((B, C), img_feats.dtype),
                   jax.ShapeDtypeStruct((B, D), img_feats.dtype)),
        grid=(1,),
        in_specs=[pl.BlockSpec((B, D), lambda i: (0, 0)),
                  pl.BlockSpec((C, D), lambda i: (0, 0)),
                  pl.BlockSpec(memory_space=pltpu.MemorySpace.SMEM)],
        out_specs=(pl.BlockSpec((B, C), lambda i: (0, 0)),
                   pl.BlockSpec((B, D), lambda i: (0, 0))),
        compiler_params=pltpu.CompilerParams(
            dimension_semantics=("arbitrary",),
            vmem_limit_bytes=_VMEM_LIMIT),
    )(img_feats, txt_feats, ls)


# --------------------------- Model (glue in JAX) ----------------------------

def residual_block(x, blk, causal):
    """CLIP ResidualAttentionBlock: x += MHA(LN1(x)); x += MLP(LN2(x)).
    Residual adds are fused into the projection epilogues (f32)."""
    H = blk["n_heads"]
    B, S, D = x.shape
    Dh = D // H
    # LN1 fused with the QKV projection; heads split outside (small activation).
    qkv = fused_ln_linear(x, blk["ln1_g"], blk["ln1_b"],
                          blk["attn_w_qkv"], blk["attn_b_qkv"])     # (B,S,3D)
    qkv = qkv.reshape(B, S, 3, H, Dh).transpose(2, 0, 3, 1, 4)      # (3,B,H,S,Dh)
    o = attention(qkv[0], qkv[1], qkv[2],
                  scale=1.0 / math.sqrt(Dh), causal=causal)         # (B,H,S,Dh)
    o = o.transpose(0, 2, 1, 3).reshape(B, S, D)
    x = linear(o, blk["attn_w_out"], blk["attn_b_out"], residual=x)
    # LN2 fused with MLP up-projection + QuickGELU; down-proj fuses residual.
    h = fused_ln_linear(x, blk["ln2_g"], blk["ln2_b"],
                        blk["mlp_w1"], blk["mlp_b1"], activation="quick_gelu")
    return linear(h, blk["mlp_w2"], blk["mlp_b2"], residual=x)


def prompt_learner(p):
    """PromptLearner.forward with prompt_pos=2: cat([prefix, ctx, suffix])."""
    n_cls = p["n_cls"]
    ctx = jnp.broadcast_to(p["ctx"], (n_cls, p["n_ctx"], p["ctx_dim"]))
    prompts = jnp.concatenate([p["token_prefix"], ctx, p["token_suffix"]], axis=1)
    return prompts, p["tokenized_prompts"]


def text_encoder(prompts, tokenized_prompts, p):
    x = (prompts + p["text_pos_emb"][None]).astype(jnp.bfloat16)   # (n_cls,S,D)
    for blk in p["text_blocks"]:
        x = residual_block(x, blk, causal=True)
    # Gather EOT rows first (LN is per-row, so gather-then-LN == LN-then-gather),
    # then fuse ln_final into the text projection.
    eot = jnp.argmax(tokenized_prompts, axis=-1)
    x_eot = x[jnp.arange(x.shape[0]), eot]                          # (n_cls, D)
    zero_b = jnp.zeros((p["text_projection"].shape[1],), jnp.float32)
    return fused_ln_linear(x_eot, p["ln_final_g"], p["ln_final_b"],
                           p["text_projection"], zero_b,
                           out_dtype=jnp.float32)


def image_encoder(image, p):
    # layout: image is NCHW, patchify to (B, n_patches, C*ph*pw)
    B, C, H, W = image.shape
    ph = pw = p["patch"]
    gh, gw = H // ph, W // pw
    patches = image.reshape(B, C, gh, ph, gw, pw)
    patches = patches.transpose(0, 2, 4, 1, 3, 5).reshape(B, gh * gw, C * ph * pw)

    zb = jnp.zeros((p["vis_width"],), jnp.float32)
    x = linear(patches, p["conv1_w"], zb, out_dtype=jnp.bfloat16)   # conv1 as matmul
    cls = jnp.broadcast_to(p["class_embedding"].astype(jnp.bfloat16)[None, None, :],
                           (B, 1, p["vis_width"]))
    x = jnp.concatenate([cls, x], axis=1)
    x = x + p["vis_pos_emb"][None].astype(jnp.bfloat16)
    x = layer_norm(x, p["ln_pre_g"], p["ln_pre_b"])

    for blk in p["vis_blocks"]:
        x = residual_block(x, blk, causal=False)    # no mask DMA / no mask add

    zpb = jnp.zeros((p["vis_proj"].shape[1],), jnp.float32)
    return fused_ln_linear(x[:, 0, :], p["ln_post_g"], p["ln_post_b"],
                           p["vis_proj"], zpb, out_dtype=jnp.float32)


def clip_forward(image, p):
    """CLIP.forward (test=False branch) -> (logits, normalized image features)."""
    image_features = image_encoder(image, p)                    # no_grad in torch
    prompts, tokenized_prompts = prompt_learner(p)
    text_features = text_encoder(prompts, tokenized_prompts, p)
    logits, image_features_n = clip_logits(image_features, text_features,
                                           p["logit_scale"])
    return logits, image_features_n


# ------------------------------- Parameters ---------------------------------

def init_block_params(key, d, n_heads):
    ks = jax.random.split(key, 4)
    # Matmul weights are stored in bf16 (pre-cast once; never re-cast per call).
    nrm = lambda k, s: (0.02 * jax.random.normal(k, s, jnp.float32)).astype(jnp.bfloat16)
    return dict(
        n_heads=n_heads,
        ln1_g=jnp.ones((d,), jnp.float32), ln1_b=jnp.zeros((d,), jnp.float32),
        attn_w_qkv=nrm(ks[0], (d, 3 * d)), attn_b_qkv=jnp.zeros((3 * d,), jnp.float32),
        attn_w_out=nrm(ks[1], (d, d)), attn_b_out=jnp.zeros((d,), jnp.float32),
        ln2_g=jnp.ones((d,), jnp.float32), ln2_b=jnp.zeros((d,), jnp.float32),
        mlp_w1=nrm(ks[2], (d, 4 * d)), mlp_b1=jnp.zeros((4 * d,), jnp.float32),
        mlp_w2=nrm(ks[3], (4 * d, d)), mlp_b2=jnp.zeros((d,), jnp.float32),
    )


def init_params(key, *, n_cls, n_ctx, suffix_len, ctx_dim, embed_dim,
                vis_width, patch, img_size, n_heads, n_layers, vocab):
    seq_len = 1 + n_ctx + suffix_len
    n_patches = (img_size // patch) ** 2
    keys = iter(jax.random.split(key, 16))
    nrm = lambda k, s, std=0.02: std * jax.random.normal(k, s, jnp.float32)
    nrm_bf16 = lambda k, s, std=0.02: nrm(k, s, std).astype(jnp.bfloat16)

    token_embedding = nrm(next(keys), (vocab, ctx_dim))
    # Synthetic "tokenized" prompts: SOT, n_ctx placeholders, name tokens,
    # EOT (largest id -> argmax picks it, as in CLIP), zero padding.
    # TODO(synk): real byte-pair _Tokenizer / tokenize() not reproduced.
    rows = []
    for c in range(n_cls):
        name_len = 1 + (c % 2)
        rows.append([vocab - 2] + [10] * n_ctx + [20 + c] * name_len
                    + [vocab - 1] + [0] * (suffix_len - name_len - 1))
    tokenized_prompts = jnp.array(rows, dtype=jnp.int32)        # (n_cls, seq_len)
    embedding = token_embedding[tokenized_prompts]              # (n_cls, seq, d)

    text_blocks = [init_block_params(next(keys), ctx_dim, n_heads)
                   for _ in range(n_layers)]
    vis_blocks = [init_block_params(next(keys), vis_width, n_heads)
                  for _ in range(n_layers)]

    return dict(
        n_cls=n_cls, n_ctx=n_ctx, ctx_dim=ctx_dim,
        patch=patch, vis_width=vis_width,
        # PromptLearner buffers / params
        ctx=nrm(next(keys), (1, n_ctx, ctx_dim)),
        token_prefix=embedding[:, :1, :],
        token_suffix=embedding[:, 1 + n_ctx:, :],
        tokenized_prompts=tokenized_prompts,
        # TextEncoder
        text_pos_emb=nrm(next(keys), (seq_len, ctx_dim), std=0.01),
        text_blocks=text_blocks,
        ln_final_g=jnp.ones((ctx_dim,), jnp.float32),
        ln_final_b=jnp.zeros((ctx_dim,), jnp.float32),
        text_projection=nrm_bf16(next(keys), (ctx_dim, embed_dim)),
        logit_scale=jnp.array(math.log(1.0 / 0.07), jnp.float32),
        # Image encoder (ViT-style)
        conv1_w=nrm_bf16(next(keys), (3 * patch * patch, vis_width)),
        class_embedding=nrm(next(keys), (vis_width,)),
        vis_pos_emb=nrm(next(keys), (n_patches + 1, vis_width), std=0.01),
        ln_pre_g=jnp.ones((vis_width,), jnp.float32),
        ln_pre_b=jnp.zeros((vis_width,), jnp.float32),
        vis_blocks=vis_blocks,
        ln_post_g=jnp.ones((vis_width,), jnp.float32),
        ln_post_b=jnp.zeros((vis_width,), jnp.float32),
        vis_proj=nrm_bf16(next(keys), (vis_width, embed_dim)),
    )


# ---------------------------------- Main -------------------------------------

if __name__ == "__main__":
    key = jax.random.PRNGKey(0)
    k_param, k_img = jax.random.split(key)

    n_cls, n_ctx, suffix_len = 4, 4, 3        # seq_len = 8
    ctx_dim = embed_dim = vis_width = 32
    patch, img_size = 8, 16                   # 2x2 = 4 patches + cls token
    n_heads, n_layers, vocab = 4, 2, 64

    params = init_params(k_param, n_cls=n_cls, n_ctx=n_ctx, suffix_len=suffix_len,
                         ctx_dim=ctx_dim, embed_dim=embed_dim, vis_width=vis_width,
                         patch=patch, img_size=img_size, n_heads=n_heads,
                         n_layers=n_layers, vocab=vocab)

    image = jax.random.normal(k_img, (2, 3, img_size, img_size), jnp.float32)  # NCHW

    logits, image_features = clip_forward(image, params)
    jax.block_until_ready((logits, image_features))

    assert logits.shape == (2, n_cls)
    assert image_features.shape == (2, embed_dim)
    assert bool(jnp.all(jnp.isfinite(logits)))
    assert bool(jnp.all(jnp.isfinite(image_features)))
    print("KERNEL_OK")
</pallas_src>

<mosaic_0001>
module attributes {stable_mosaic.version = 11 : i64} {
  func.func @_matmul_fullk_kernel(%arg0: i32, %arg1: i32, %arg2: memref<8x192xbf16, #tpu.memory_space<vmem>>, %arg3: memref<192x32xbf16, #tpu.memory_space<vmem>>, %arg4: memref<1x32xf32, #tpu.memory_space<vmem>>, %arg5: memref<8x32xbf16, #tpu.memory_space<vmem>>) attributes {dimension_semantics = [#tpu.dimension_semantics<parallel>, #tpu.dimension_semantics<parallel>], iteration_bounds = array<i64: 1, 1>, scalar_prefetch = 0 : i64, scratch_operands = 0 : i64, tpu.core_type = #tpu.core_type<tc>, window_params = [{transform_indices = @transform_0, window_bounds = array<i64: 8, 192>}, {transform_indices = @transform_1, window_bounds = array<i64: 192, 32>}, {transform_indices = @transform_2, window_bounds = array<i64: 1, 32>}, {transform_indices = @transform_3, window_bounds = array<i64: 8, 32>}]} {
    %c0 = arith.constant 0 : index
    %c0_0 = arith.constant 0 : index
    %0 = vector.load %arg2[%c0, %c0_0] : memref<8x192xbf16, #tpu.memory_space<vmem>>, vector<8x192xbf16>
    %c0_1 = arith.constant 0 : index
    %c0_2 = arith.constant 0 : index
    %1 = vector.load %arg3[%c0_1, %c0_2] : memref<192x32xbf16, #tpu.memory_space<vmem>>, vector<192x32xbf16>
    %cst = arith.constant dense<0.000000e+00> : vector<8x32xf32>
    %2 = tpu.matmul %0, %1, %cst {dimension_numbers = #tpu.dot_dimension_numbers<[1], [0], [0], [1], [0, 0, 1, 1], [], []>} : vector<8x192xbf16>, vector<192x32xbf16>, vector<8x32xf32> -> vector<8x32xf32>
    %c0_3 = arith.constant 0 : index
    %c0_4 = arith.constant 0 : index
    %3 = vector.load %arg4[%c0_3, %c0_4] : memref<1x32xf32, #tpu.memory_space<vmem>>, vector<1x32xf32>
    %4 = vector.broadcast %3 : vector<1x32xf32> to vector<8x32xf32>
    %5 = arith.addf %2, %4 : vector<8x32xf32>
    %6 = arith.truncf %5 : vector<8x32xf32> to vector<8x32xbf16>
    %c0_5 = arith.constant 0 : index
    %c0_6 = arith.constant 0 : index
    %7 = vector.load %arg5[%c0_5, %c0_6] : memref<8x32xbf16, #tpu.memory_space<vmem>>, vector<8x32xbf16>
    tpu.vector_store %arg5[%c0_5, %c0_6], %6 {strides = array<i32>} : memref<8x32xbf16, #tpu.memory_space<vmem>>, vector<8x32xbf16>,
    return
  }
  func.func @transform_0(%arg0: i32, %arg1: i32) -> (i32, i32) {
    %c0_i32 = arith.constant 0 : i32
    %c0_i32_0 = arith.constant 0 : i32
    return %arg0, %c0_i32 : i32, i32
  }
  func.func @transform_1(%arg0: i32, %arg1: i32) -> (i32, i32) {
    %c0_i32 = arith.constant 0 : i32
    %c0_i32_0 = arith.constant 0 : i32
    return %c0_i32, %arg1 : i32, i32
  }
  func.func @transform_2(%arg0: i32, %arg1: i32) -> (i32, i32) {
    %c0_i32 = arith.constant 0 : i32
    %c0_i32_0 = arith.constant 0 : i32
    return %c0_i32, %arg1 : i32, i32
  }
  func.func @transform_3(%arg0: i32, %arg1: i32) -> (i32, i32) {
    %c0_i32 = arith.constant 0 : i32
    return %arg0, %arg1 : i32, i32
  }
}

</mosaic_0001>

<llo_original>
// kernel: tpu_custom_call.1
$region0: #{tpu_custom_call.1}
  #allocation0 [shape = 'u32[]', space=smem, size = 0x4, offset = 0x4, fixed_abs, tag = 'smem constant byte address 0x4 - core index']
  #allocation1 [shape = 'u32[144,128]{1,0:T(1,128)}', space=vmem, size = 0x12000, scoped, tag = 'internal scratch']
  %s0 = inlined_call_operand.vmem [shape: bf16[8,192], index: 0, kind: input, shape index: {}]
  %s1 = inlined_call_operand.vmem [shape: bf16[192,32], index: 1, kind: input, shape index: {}]
  %s2 = inlined_call_operand.vmem [shape: f32[1,32], index: 2, kind: input, shape index: {}]
  %s3 = inlined_call_operand.hbm [shape: bf16[8,32], index: 3, kind: output, shape index: {}]
  %s4 = sld [smem:[#allocation0]]
  $region22: #{tpu_custom_call.1} parent=0
    _
  %s6 = ssub.s32 1, %s4
  %s7 = scalar_select 0, %s6, %s4
  $region1: #{tpu_custom_call.1} parent=0
    #allocation2 [shape = 'u8[2048]{0}', space=vmem, size = 0x800, scoped, tag = 'output window, operand 0, single buffered']
    #allocation3 [shape = 's32[1]{0}', space=sflag, size = 0x4, scoped, tag = 'scoped memory for tpu_custom_call.1']
    %8 = vsyncpa [#allocation3], 0
    // Predicated region
    $region2: #{tpu_custom_call.1} parent=1 // pred_check
      _
    $region3: #{tpu_custom_call.1} parent=1 // pred_check_branch
      %10 = sbr.rel (0) target = $region5
    $region4: #{tpu_custom_call.1} parent=1 // pred_region
      _
    $region5: #{tpu_custom_call.1} parent=1 // pred_fallthru
      _
    // Predicated region
    $region6: #{tpu_custom_call.1} parent=1 // pred_check
      _
    $region7: #{tpu_custom_call.1} parent=1 // pred_check_branch
      %12 = sbr.rel (0) target = $region9
    $region8: #{tpu_custom_call.1} parent=1 // pred_region
      _
    $region9: #{tpu_custom_call.1} parent=1 // pred_fallthru
      _
    // Predicated region
    $region10: #{tpu_custom_call.1} parent=1 // pred_check
      _
    $region11: #{tpu_custom_call.1} parent=1 // pred_check_branch
      %14 = sbr.rel (0) target = $region13
    $region12: #{tpu_custom_call.1} parent=1 // pred_region
      _
    $region13: #{tpu_custom_call.1} parent=1 // pred_fallthru
      _
    %v16 = vld [vmem:[%s0] sm:$0xff]
    %v17 = vld [vmem:[%s1] sm:$0xf]
    %v18 = vld [vmem:[%s1 + $0x4] sm:$0xf]
    %v19 = vld [vmem:[%s1 + $0x8] sm:$0xf]
    %v20 = vld [vmem:[%s1 + $0xc] sm:$0xf]
    %v21 = vld [vmem:[%s1 + $0x10] sm:$0xf]
    %v22 = vld [vmem:[%s1 + $0x14] sm:$0xf]
    %v23 = vld [vmem:[%s1 + $0x18] sm:$0xf]
    %v24 = vld [vmem:[%s1 + $0x1c] sm:$0xf]
    %v25 = vld [vmem:[%s1 + $0x20] sm:$0xf]
    %v26 = vld [vmem:[%s1 + $0x24] sm:$0xf]
    %v27 = vld [vmem:[%s1 + $0x28] sm:$0xf]
    %v28 = vld [vmem:[%s1 + $0x2c] sm:$0xf]
    %v29 = vld [vmem:[%s1 + $0x30] sm:$0xf]
    %v30 = vld [vmem:[%s1 + $0x34] sm:$0xf]
    %v31 = vld [vmem:[%s1 + $0x38] sm:$0xf]
    %v32 = vld [vmem:[%s1 + $0x3c] sm:$0xf]
    %v33 = vld [vmem:[%s1 + $0x40] sm:$0xf]
    %v34 = vld [vmem:[%s1 + $0x44] sm:$0xf]
    %v35 = vld [vmem:[%s1 + $0x48] sm:$0xf]
    %v36 = vld [vmem:[%s1 + $0x4c] sm:$0xf]
    %v37 = vld [vmem:[%s1 + $0x50] sm:$0xf]
    %v38 = vld [vmem:[%s1 + $0x54] sm:$0xf]
    %v39 = vld [vmem:[%s1 + $0x58] sm:$0xf]
    %v40 = vld [vmem:[%s1 + $0x5c] sm:$0xf]
    %v41 = vld [vmem:[%s2] sm:$0x1]
    %v43 = vlaneseq
    %v44 = vshrl.u32 %v43, 7
    %v45 = vsub.s32 0, %v44
    %v46 = vrot.slane %v41, %v45
    %v49 = vunpack.c.l.b16 %v16
    %v50 = vunpack.c.h.b16 %v16
    %v51 = vpack.c.b16 %v49, %v49
    %v52 = vpack.c.b16 %v50, %v50
    %v78 = vunpack.c.l.b16 %v17
    %v79 = vunpack.c.l.b16 %v18
    %v80 = vunpack.c.l.b16 %v19
    %v81 = vunpack.c.l.b16 %v20
    %v82 = vunpack.c.l.b16 %v21
    %v83 = vunpack.c.l.b16 %v22
    %v84 = vunpack.c.l.b16 %v23
    %v85 = vunpack.c.l.b16 %v24
    %v86 = vunpack.c.l.b16 %v25
    %v87 = vunpack.c.l.b16 %v26
    %v88 = vunpack.c.l.b16 %v27
    %v89 = vunpack.c.l.b16 %v28
    %v90 = vunpack.c.l.b16 %v29
    %v91 = vunpack.c.l.b16 %v30
    %v92 = vunpack.c.l.b16 %v31
    %v93 = vunpack.c.l.b16 %v32
    %v94 = vunpack.c.l.b16 %v33
    %v95 = vunpack.c.l.b16 %v34
    %v96 = vunpack.c.l.b16 %v35
    %v97 = vunpack.c.l.b16 %v36
    %v98 = vunpack.c.l.b16 %v37
    %v99 = vunpack.c.l.b16 %v38
    %v100 = vunpack.c.l.b16 %v39
    %v101 = vunpack.c.l.b16 %v40
    %v102 = vpack.c.b16 %v79, %v78
    %v103 = vpack.c.b16 %v81, %v80
    %v104 = vpack.c.b16 %v83, %v82
    %v105 = vpack.c.b16 %v85, %v84
    %v106 = vpack.c.b16 %v87, %v86
    %v107 = vpack.c.b16 %v89, %v88
    %v108 = vpack.c.b16 %v91, %v90
    %v109 = vpack.c.b16 %v93, %v92
    %v110 = vpack.c.b16 %v95, %v94
    %v111 = vpack.c.b16 %v97, %v96
    %v112 = vpack.c.b16 %v99, %v98
    %v113 = vpack.c.b16 %v101, %v100
    %vm126 = vcmask 523264
    %v128 = vsel %vm126, %v52, 0
    %130 = vmatprep.subr.bf16.mxu0 0
    %131 = vmatpush1.bf16.msra.mxu0 %v109
    %132 = vmatprep.subr.bf16.mxu0 0
    %133 = vmatpush1.bf16.msra.mxu0 %v108
    %134 = vmatprep.subr.bf16.mxu0 0
    %135 = vmatpush1.bf16.msra.mxu0 %v107
    %136 = vmatprep.subr.bf16.mxu0 0
    %137 = vmatpush1.bf16.msra.mxu0 %v106
    %138 = vmatprep.subr.bf16.mxu0 0
    %139 = vmatpush1.bf16.msra.mxu0 %v105
    %140 = vmatprep.subr.bf16.mxu0 0
    %141 = vmatpush1.bf16.msra.mxu0 %v104
    %142 = vmatprep.subr.bf16.mxu0 0
    %143 = vmatpush1.bf16.msra.mxu0 %v103
    %144 = vmatprep.subr.bf16.mxu0 0
    %145 = vmatpush1.bf16.msra.mxu0 %v102
    %146 = vmatprep.subr.bf16.mxu0 0
    %147 = vmatpush2.bf16.msra.mxu0 0
    %148 = vmatprep.subr.bf16.mxu0 0
    %149 = vmatpush2.bf16.msra.mxu0 0
    %150 = vmatprep.subr.bf16.mxu0 0
    %151 = vmatpush2.bf16.msra.mxu0 0
    %152 = vmatprep.subr.bf16.mxu0 0
    %153 = vmatpush2.bf16.msra.mxu0 0
    %154 = vmatprep.subr.bf16.mxu0 0
    %155 = vmatpush2.bf16.msra.mxu0 %v113
    %156 = vmatprep.subr.bf16.mxu0 0
    %157 = vmatpush2.bf16.msra.mxu0 %v112
    %158 = vmatprep.subr.bf16.mxu0 0
    %159 = vmatpush2.bf16.msra.mxu0 %v111
    %160 = vmatprep.subr.bf16.mxu0 0
    %161 = vmatpush2.bf16.msra.mxu0 %v110
    %162 = vmatprep.mubr.bf16.mxu0 %v128
    %163 = vmatmul.mubr.bf16.gmra.mxu0 %v51
    %v164 = vpop.f32.mrf.mxu0
    %v165 = vadd.f32 %v46, %v164
    %v166 = vpop.f32.mrf.mxu0
    %v167 = vpop.f32.mrf.mxu0
    %v168 = vpop.f32.mrf.mxu0
    %169 = vdwg.mxu0
    %v170 = vpack.c.bf16 %v165, %v165
    %vm171 = vcmask 257024
    %172 = vst.msk [vmem:[#allocation2] sm:$0xf] %vm171, %v170
    // Predicated region
    $region14: #{tpu_custom_call.1} parent=1 // pred_check
      _
    $region15: #{tpu_custom_call.1} parent=1 // pred_check_branch
      %174 = sbr.rel (0) target = $region17
    $region16: #{tpu_custom_call.1} parent=1 // pred_region
      %s176 = ssub.s32 64, 64
      %177 = vsyncadd [#allocation3], %s176
      %s179 = sshll.u32 [#allocation2], 4
      %s180 = int_to_ptr.vmem [resolvable:$true] %s179
      %182 = dma.vmem_to_hbm [thread:$0]  %s180, 64, %s3, [#allocation3]
    $region17: #{tpu_custom_call.1} parent=1 // pred_fallthru
      _
    // Predicated region
    $region18: #{tpu_custom_call.1} parent=1 // pred_check
      _
    $region19: #{tpu_custom_call.1} parent=1 // pred_check_branch
      %184 = sbr.rel (0) target = $region21
    $region20: #{tpu_custom_call.1} parent=1 // pred_region
      %185 = dma.done [#allocation3], 64
    $region21: #{tpu_custom_call.1} parent=1 // pred_fallthru
      _
    %186 = vsyncpa [#allocation3], 1

</llo_original>
